<compile_context>
chip_gen: v7x
topology: tpu7x:2x2x1
jax: 0.10.0
libtpu: 0.0.40
codegen_flags: <defaults>
</compile_context>

<pallas_src>
import functools

import jax
import jax.numpy as jnp
from jax.experimental import pallas as pl
from jax.experimental.pallas import tpu as pltpu

EPS = 1e-5
VMEM_LIMIT = 32 * 1024 * 1024          # fits v5e/v6e and v7x scoped VMEM defaults
FUSED_VMEM_BUDGET = 24 * 1024 * 1024   # conservative footprint cap for the fused path


def _round_up(a, b):
    return (a + b - 1) // b * b


def _cdiv(a, b):
    return (a + b - 1) // b


# ---------------------------------------------------------------------------
# Fused single-kernel path: fc1 + ReLU + BN (batch stats) + fc2, all in VMEM.
# ---------------------------------------------------------------------------
def fused_kernel(x_ref, w1_ref, b1_ref, gamma_ref, beta_ref, w2_ref, b2_ref, o_ref):
    w1 = w1_ref[...]
    x = x_ref[...].astype(w1.dtype)
    h = jnp.dot(x, w1, preferred_element_type=jnp.float32) + b1_ref[...]
    h = jnp.maximum(h, 0.0)                                        # [n, 128] f32

    # Batch statistics via ones-row MXU matmuls (two-pass / subtract-mean variance).
    n_rows = h.shape[0]
    inv_n = 1.0 / n_rows
    ones = jnp.ones((1, n_rows), jnp.float32)
    mean = jnp.dot(ones, h, preferred_element_type=jnp.float32) * inv_n          # [1,128]
    centered = h - mean
    var = jnp.dot(ones, centered * centered, preferred_element_type=jnp.float32) * inv_n

    scale = gamma_ref[...] * jax.lax.rsqrt(var + EPS)              # [1,128]
    shift = beta_ref[...] - mean * scale                           # [1,128]

    w2 = w2_ref[...]
    hn = (h * scale + shift).astype(w2.dtype)
    o_ref[...] = jnp.dot(hn, w2, preferred_element_type=jnp.float32) + b2_ref[...]


# ---------------------------------------------------------------------------
# Tiled path, pass 1: per batch tile -> h = relu(x @ w1 + b1); masked partial stats.
# ---------------------------------------------------------------------------
def fc1_stats_kernel(x_ref, w1_ref, b1_ref, h_ref, stats_ref, *, tile_n, n_valid):
    w1 = w1_ref[...]
    x = x_ref[...].astype(w1.dtype)
    h = jnp.dot(x, w1, preferred_element_type=jnp.float32) + b1_ref[...]
    h = jnp.maximum(h, 0.0)

    # Zero rows beyond n_valid: the ragged last block reads unspecified values from
    # the out-of-bounds region; zeroing makes the stats exact and the stored h clean
    # (the OOB rows of the store itself are dropped by the pipeline).
    row = jax.lax.broadcasted_iota(jnp.int32, (tile_n, 1), 0) + pl.program_id(0) * tile_n
    h = jnp.where(row < n_valid, h, 0.0)

    h_ref[...] = h.astype(h_ref.dtype)                             # bf16 store when enabled

    # Batch reduction routed through the MXU; stats packed lane-dense: [sum | sumsq].
    ones = jnp.ones((1, tile_n), jnp.float32)
    s1 = jnp.dot(ones, h, preferred_element_type=jnp.float32)      # [1, 128]
    s2 = jnp.dot(ones, h * h, preferred_element_type=jnp.float32)  # [1, 128]
    stats_ref[0, :, :] = jnp.concatenate([s1, s2], axis=1)         # [1, 256]


# ---------------------------------------------------------------------------
# Tiled path, pass 2: pure GEMM with BN scale/shift pre-folded into w2'/b2'.
# ---------------------------------------------------------------------------
def fc2_kernel(h_ref, w2_ref, b2_ref, o_ref):
    w2 = w2_ref[...]
    h = h_ref[...].astype(w2.dtype)
    o_ref[...] = jnp.dot(h, w2, preferred_element_type=jnp.float32) + b2_ref[...]


def classifier_forward(x, w1, b1, gamma, beta, w2, b2, *,
                       use_bf16_matmul=True, tile_n_max=1024,
                       force_tiled=False, fused_vmem_budget=FUSED_VMEM_BUDGET):
    """x: [N,256]. Pre-transposed weights: w1 [256,128], w2 [128,C]. Bias/affine: [1,dim]."""
    n, f = x.shape
    assert f == 256
    c = w2.shape[1]
    c_pad = _round_up(c, 128)

    # Pad only the (tiny) class dimension so the output store is lane-dense.
    w2_p = jnp.pad(w2, ((0, 0), (0, c_pad - c))) if c_pad != c else w2
    b2_p = jnp.pad(b2, ((0, 0), (0, c_pad - c))) if c_pad != c else b2

    w1_k = w1.astype(jnp.bfloat16) if use_bf16_matmul else w1
    h_dtype = jnp.bfloat16 if use_bf16_matmul else jnp.float32

    # ---------------- Fused single-kernel path (h never leaves VMEM) ----------------
    # Rough VMEM footprint: double-buffered x/out + ~4 h-sized f32 temporaries + weights.
    fused_bytes = (4 * n * (2 * (256 + c_pad) + 4 * 128)
                   + 4 * (256 * 128 + 2 * 128 * c_pad) + (1 << 20))
    if (not force_tiled) and fused_bytes <= fused_vmem_budget:
        w2_k = w2_p.astype(jnp.bfloat16) if use_bf16_matmul else w2_p
        out_p = pl.pallas_call(
            fused_kernel,
            out_shape=jax.ShapeDtypeStruct((n, c_pad), jnp.float32),
            grid_spec=pltpu.PrefetchScalarGridSpec(
                num_scalar_prefetch=0,
                grid=(1,),
                in_specs=[
                    pl.BlockSpec((n, 256), lambda i: (0, 0)),     # x (full block; no pad)
                    pl.BlockSpec((256, 128), lambda i: (0, 0)),   # w1
                    pl.BlockSpec((1, 128), lambda i: (0, 0)),     # b1
                    pl.BlockSpec((1, 128), lambda i: (0, 0)),     # gamma
                    pl.BlockSpec((1, 128), lambda i: (0, 0)),     # beta
                    pl.BlockSpec((128, c_pad), lambda i: (0, 0)), # w2 (padded)
                    pl.BlockSpec((1, c_pad), lambda i: (0, 0)),   # b2 (padded)
                ],
                out_specs=pl.BlockSpec((n, c_pad), lambda i: (0, 0)),
            ),
            compiler_params=pltpu.CompilerParams(
                dimension_semantics=("arbitrary",),
                vmem_limit_bytes=VMEM_LIMIT,
            ),
            cost_estimate=pl.CostEstimate(
                flops=2 * n * 256 * 128 + 2 * n * 128 * c_pad + 8 * n * 128,
                transcendentals=0,
                bytes_accessed=4 * (n * 256 + n * c_pad + 256 * 128 + 128 * c_pad),
            ),
        )(x, w1_k, b1, gamma, beta, w2_k, b2_p)
        return out_p[:, :c]

    # ---------------- Tiled two-pass path (large batches) ----------------
    # >=2 tiles so v7x's two TensorCores both get work; tile multiple of 16 sublanes
    # (safe for the bf16 h intermediate). No padded copy of x: ragged tail handled
    # in-kernel, OOB reads masked / OOB writes dropped.
    tile_n = max(16, min(tile_n_max, _round_up(_cdiv(n, 2), 16)))
    n_tiles = _cdiv(n, tile_n)

    k1 = functools.partial(fc1_stats_kernel, tile_n=tile_n, n_valid=n)
    h, partial_stats = pl.pallas_call(
        k1,
        out_shape=(jax.ShapeDtypeStruct((n, 128), h_dtype),
                   jax.ShapeDtypeStruct((n_tiles, 1, 256), jnp.float32)),
        grid_spec=pltpu.PrefetchScalarGridSpec(
            num_scalar_prefetch=0,
            grid=(n_tiles,),
            in_specs=[
                pl.BlockSpec((tile_n, 256), lambda i: (i, 0)),    # x tile
                pl.BlockSpec((256, 128), lambda i: (0, 0)),       # w1
                pl.BlockSpec((1, 128), lambda i: (0, 0)),         # b1
            ],
            out_specs=(
                pl.BlockSpec((tile_n, 128), lambda i: (i, 0)),    # h tile (bf16 when enabled)
                pl.BlockSpec((1, 1, 256), lambda i: (i, 0, 0)),   # lane-dense per-tile stats
            ),
        ),
        compiler_params=pltpu.CompilerParams(
            dimension_semantics=("parallel",),
            vmem_limit_bytes=VMEM_LIMIT,
        ),
        cost_estimate=pl.CostEstimate(
            flops=2 * n * 256 * 128 + 6 * n * 128,
            transcendentals=0,
            bytes_accessed=4 * n * 256 + 4 * 256 * 128
                           + h_dtype(0).dtype.itemsize * n * 128 + 4 * n_tiles * 256,
        ),
    )(x, w1_k, b1)

    # Tiny XLA glue: reduce partial stats, fold BN affine into fc2's weights/bias.
    stats = jnp.sum(partial_stats, axis=0)                         # [1, 256]
    inv_n = 1.0 / float(n)
    mean = stats[:, :128] * inv_n                                  # [1, 128]
    var = jnp.maximum(stats[:, 128:] * inv_n - mean * mean, 0.0)   # biased variance
    scale = gamma * jax.lax.rsqrt(var + EPS)                       # [1, 128]
    shift = beta - mean * scale                                    # [1, 128]
    w2_f = w2_p * scale.reshape(128, 1)                            # (h*scale) @ w2 == h @ w2_f
    b2_f = b2_p + shift @ w2_p                                     # shift @ w2 folded into bias
    if use_bf16_matmul:
        w2_f = w2_f.astype(jnp.bfloat16)

    out_p = pl.pallas_call(
        fc2_kernel,
        out_shape=jax.ShapeDtypeStruct((n, c_pad), jnp.float32),
        grid_spec=pltpu.PrefetchScalarGridSpec(
            num_scalar_prefetch=0,
            grid=(n_tiles,),
            in_specs=[
                pl.BlockSpec((tile_n, 128), lambda i: (i, 0)),    # h tile
                pl.BlockSpec((128, c_pad), lambda i: (0, 0)),     # folded w2'
                pl.BlockSpec((1, c_pad), lambda i: (0, 0)),       # folded b2'
            ],
            out_specs=pl.BlockSpec((tile_n, c_pad), lambda i: (i, 0)),
        ),
        compiler_params=pltpu.CompilerParams(
            dimension_semantics=("parallel",),
            vmem_limit_bytes=VMEM_LIMIT,
        ),
        cost_estimate=pl.CostEstimate(
            flops=2 * n * 128 * c_pad + 2 * n * c_pad,
            transcendentals=0,
            bytes_accessed=h_dtype(0).dtype.itemsize * n * 128
                           + 4 * (128 * c_pad + c_pad + n * c_pad),
        ),
    )(h, w2_f, b2_f)

    return out_p[:, :c]


def init_params(key, num_classes):
    k1, k2, k3, k4 = jax.random.split(key, 4)
    bound1 = 1.0 / jnp.sqrt(256.0)
    w1 = jax.random.uniform(k1, (256, 128), jnp.float32, -bound1, bound1)          # fc1.weight^T
    b1 = jax.random.uniform(k2, (1, 128), jnp.float32, -bound1, bound1)            # fc1.bias
    gamma = jnp.ones((1, 128), jnp.float32)                                        # batchnorm.weight
    beta = jnp.zeros((1, 128), jnp.float32)                                        # batchnorm.bias
    bound2 = 1.0 / jnp.sqrt(128.0)
    w2 = jax.random.uniform(k3, (128, num_classes), jnp.float32, -bound2, bound2)  # fc2.weight^T
    b2 = jax.random.uniform(k4, (1, num_classes), jnp.float32, -bound2, bound2)    # fc2.bias
    return w1, b1, gamma, beta, w2, b2


def reference_forward(x, w1, b1, gamma, beta, w2, b2):
    h = jnp.maximum(x @ w1 + b1, 0.0)
    mean = jnp.mean(h, axis=0, keepdims=True)
    var = jnp.mean((h - mean) ** 2, axis=0, keepdims=True)
    h = (h - mean) / jnp.sqrt(var + EPS) * gamma + beta
    return h @ w2 + b2


if __name__ == "__main__":
    num_classes = 10
    key = jax.random.PRNGKey(0)
    kx1, kx2, kp = jax.random.split(key, 3)
    params = init_params(kp, num_classes)

    # Case 1: fused single-kernel path, f32 numerics, odd batch (no padding anywhere).
    x1 = jax.random.normal(kx1, (37, 256), jnp.float32)
    ref1 = reference_forward(x1, *params)
    out1 = jax.block_until_ready(classifier_forward(x1, *params, use_bf16_matmul=False))
    assert out1.shape == (37, num_classes)
    assert jnp.allclose(out1, ref1, atol=5e-4, rtol=5e-4), "fused f32 mismatch vs reference"

    # Case 2: fused path with default bf16 MXU operands (f32 accumulation).
    out1b = jax.block_until_ready(classifier_forward(x1, *params))
    assert jnp.allclose(out1b, ref1, atol=5e-2, rtol=5e-2), "fused bf16 mismatch vs reference"

    # Case 3: tiled two-pass path (forced), >=2 tiles with a ragged last tile, f32.
    x2 = jax.random.normal(kx2, (300, 256), jnp.float32)
    ref2 = reference_forward(x2, *params)
    out2 = jax.block_until_ready(
        classifier_forward(x2, *params, use_bf16_matmul=False,
                           force_tiled=True, tile_n_max=128))
    assert out2.shape == (300, num_classes)
    assert jnp.allclose(out2, ref2, atol=1e-3, rtol=1e-3), "tiled f32 mismatch vs reference"

    # Case 4: tiled path with bf16 MXU operands + bf16 h intermediate.
    out2b = jax.block_until_ready(
        classifier_forward(x2, *params, force_tiled=True, tile_n_max=128))
    assert jnp.allclose(out2b, ref2, atol=5e-2, rtol=5e-2), "tiled bf16 mismatch vs reference"

    print("KERNEL_OK")
</pallas_src>

<mosaic_0001>
module attributes {stable_mosaic.version = 11 : i64} {
  func.func @fused_kernel(%arg0: i32, %arg1: memref<37x256xf32, #tpu.memory_space<vmem>>, %arg2: memref<256x128xf32, #tpu.memory_space<vmem>>, %arg3: memref<1x128xf32, #tpu.memory_space<vmem>>, %arg4: memref<1x128xf32, #tpu.memory_space<vmem>>, %arg5: memref<1x128xf32, #tpu.memory_space<vmem>>, %arg6: memref<128x128xf32, #tpu.memory_space<vmem>>, %arg7: memref<1x128xf32, #tpu.memory_space<vmem>>, %arg8: memref<37x128xf32, #tpu.memory_space<vmem>>) attributes {dimension_semantics = [#tpu.dimension_semantics<arbitrary>], iteration_bounds = array<i64: 1>, scalar_prefetch = 0 : i64, scratch_operands = 0 : i64, tpu.core_type = #tpu.core_type<tc>, window_params = [{pipeline_mode = #tpu.pipeline_mode<synchronous>, transform_indices = @transform_0, window_bounds = array<i64: 37, 256>}, {pipeline_mode = #tpu.pipeline_mode<synchronous>, transform_indices = @transform_1, window_bounds = array<i64: 256, 128>}, {pipeline_mode = #tpu.pipeline_mode<synchronous>, transform_indices = @transform_2, window_bounds = array<i64: 1, 128>}, {pipeline_mode = #tpu.pipeline_mode<synchronous>, transform_indices = @transform_3, window_bounds = array<i64: 1, 128>}, {pipeline_mode = #tpu.pipeline_mode<synchronous>, transform_indices = @transform_4, window_bounds = array<i64: 1, 128>}, {pipeline_mode = #tpu.pipeline_mode<synchronous>, transform_indices = @transform_5, window_bounds = array<i64: 128, 128>}, {pipeline_mode = #tpu.pipeline_mode<synchronous>, transform_indices = @transform_6, window_bounds = array<i64: 1, 128>}, {pipeline_mode = #tpu.pipeline_mode<synchronous>, transform_indices = @transform_7, window_bounds = array<i64: 37, 128>}]} {
    %c0 = arith.constant 0 : index
    %c0_0 = arith.constant 0 : index
    %0 = vector.load %arg2[%c0, %c0_0] : memref<256x128xf32, #tpu.memory_space<vmem>>, vector<256x128xf32>
    %c0_1 = arith.constant 0 : index
    %c0_2 = arith.constant 0 : index
    %1 = vector.load %arg1[%c0_1, %c0_2] : memref<37x256xf32, #tpu.memory_space<vmem>>, vector<37x256xf32>
    %cst = arith.constant dense<0.000000e+00> : vector<37x128xf32>
    %2 = tpu.matmul %1, %0, %cst {dimension_numbers = #tpu.dot_dimension_numbers<[1], [0], [0], [1], [0, 0, 1, 1], [], []>} : vector<37x256xf32>, vector<256x128xf32>, vector<37x128xf32> -> vector<37x128xf32>
    %c0_3 = arith.constant 0 : index
    %c0_4 = arith.constant 0 : index
    %3 = vector.load %arg3[%c0_3, %c0_4] : memref<1x128xf32, #tpu.memory_space<vmem>>, vector<1x128xf32>
    %4 = vector.broadcast %3 : vector<1x128xf32> to vector<37x128xf32>
    %5 = arith.addf %2, %4 : vector<37x128xf32>
    %cst_5 = arith.constant 0.000000e+00 : f32
    %6 = vector.broadcast %cst_5 : f32 to vector<37x128xf32>
    %7 = arith.maximumf %5, %6 : vector<37x128xf32>
    %cst_6 = arith.constant 1.000000e+00 : f32
    %8 = vector.broadcast %cst_6 : f32 to vector<1x37xf32>
    %cst_7 = arith.constant dense<0.000000e+00> : vector<1x128xf32>
    %9 = tpu.matmul %8, %7, %cst_7 {dimension_numbers = #tpu.dot_dimension_numbers<[1], [0], [0], [1], [0, 0, 1, 1], [], []>} : vector<1x37xf32>, vector<37x128xf32>, vector<1x128xf32> -> vector<1x128xf32>
    %cst_8 = arith.constant 0.0270270277 : f32
    %10 = vector.broadcast %cst_8 : f32 to vector<1x128xf32>
    %11 = arith.mulf %9, %10 : vector<1x128xf32>
    %12 = vector.broadcast %11 : vector<1x128xf32> to vector<37x128xf32>
    %13 = arith.subf %7, %12 : vector<37x128xf32>
    %14 = arith.mulf %13, %13 : vector<37x128xf32>
    %cst_9 = arith.constant dense<0.000000e+00> : vector<1x128xf32>
    %15 = tpu.matmul %8, %14, %cst_9 {dimension_numbers = #tpu.dot_dimension_numbers<[1], [0], [0], [1], [0, 0, 1, 1], [], []>} : vector<1x37xf32>, vector<37x128xf32>, vector<1x128xf32> -> vector<1x128xf32>
    %cst_10 = arith.constant 0.0270270277 : f32
    %16 = vector.broadcast %cst_10 : f32 to vector<1x128xf32>
    %17 = arith.mulf %15, %16 : vector<1x128xf32>
    %c0_11 = arith.constant 0 : index
    %c0_12 = arith.constant 0 : index
    %18 = vector.load %arg4[%c0_11, %c0_12] : memref<1x128xf32, #tpu.memory_space<vmem>>, vector<1x128xf32>
    %cst_13 = arith.constant 9.99999974E-6 : f32
    %19 = vector.broadcast %cst_13 : f32 to vector<1x128xf32>
    %20 = arith.addf %17, %19 : vector<1x128xf32>
    %21 = math.rsqrt %20 : vector<1x128xf32>
    %22 = arith.mulf %18, %21 : vector<1x128xf32>
    %c0_14 = arith.constant 0 : index
    %c0_15 = arith.constant 0 : index
    %23 = vector.load %arg5[%c0_14, %c0_15] : memref<1x128xf32, #tpu.memory_space<vmem>>, vector<1x128xf32>
    %24 = arith.mulf %11, %22 : vector<1x128xf32>
    %25 = arith.subf %23, %24 : vector<1x128xf32>
    %c0_16 = arith.constant 0 : index
    %c0_17 = arith.constant 0 : index
    %26 = vector.load %arg6[%c0_16, %c0_17] : memref<128x128xf32, #tpu.memory_space<vmem>>, vector<128x128xf32>
    %27 = vector.broadcast %22 : vector<1x128xf32> to vector<37x128xf32>
    %28 = arith.mulf %7, %27 : vector<37x128xf32>
    %29 = vector.broadcast %25 : vector<1x128xf32> to vector<37x128xf32>
    %30 = arith.addf %28, %29 : vector<37x128xf32>
    %cst_18 = arith.constant dense<0.000000e+00> : vector<37x128xf32>
    %31 = tpu.matmul %30, %26, %cst_18 {dimension_numbers = #tpu.dot_dimension_numbers<[1], [0], [0], [1], [0, 0, 1, 1], [], []>} : vector<37x128xf32>, vector<128x128xf32>, vector<37x128xf32> -> vector<37x128xf32>
    %c0_19 = arith.constant 0 : index
    %c0_20 = arith.constant 0 : index
    %32 = vector.load %arg7[%c0_19, %c0_20] : memref<1x128xf32, #tpu.memory_space<vmem>>, vector<1x128xf32>
    %33 = vector.broadcast %32 : vector<1x128xf32> to vector<37x128xf32>
    %34 = arith.addf %31, %33 : vector<37x128xf32>
    %c0_21 = arith.constant 0 : index
    %c0_22 = arith.constant 0 : index
    %35 = vector.load %arg8[%c0_21, %c0_22] : memref<37x128xf32, #tpu.memory_space<vmem>>, vector<37x128xf32>
    tpu.vector_store %arg8[%c0_21, %c0_22], %34 {strides = array<i32>} : memref<37x128xf32, #tpu.memory_space<vmem>>, vector<37x128xf32>,
    return
  }
  func.func @transform_0(%arg0: i32) -> (i32, i32) {
    %c0_i32 = arith.constant 0 : i32
    %c0_i32_0 = arith.constant 0 : i32
    %c0_i32_1 = arith.constant 0 : i32
    return %c0_i32, %c0_i32_0 : i32, i32
  }
  func.func @transform_1(%arg0: i32) -> (i32, i32) {
    %c0_i32 = arith.constant 0 : i32
    %c0_i32_0 = arith.constant 0 : i32
    %c0_i32_1 = arith.constant 0 : i32
    return %c0_i32, %c0_i32_0 : i32, i32
  }
  func.func @transform_2(%arg0: i32) -> (i32, i32) {
    %c0_i32 = arith.constant 0 : i32
    %c0_i32_0 = arith.constant 0 : i32
    %c0_i32_1 = arith.constant 0 : i32
    return %c0_i32, %c0_i32_0 : i32, i32
  }
  func.func @transform_3(%arg0: i32) -> (i32, i32) {
    %c0_i32 = arith.constant 0 : i32
    %c0_i32_0 = arith.constant 0 : i32
    %c0_i32_1 = arith.constant 0 : i32
    return %c0_i32, %c0_i32_0 : i32, i32
  }
  func.func @transform_4(%arg0: i32) -> (i32, i32) {
    %c0_i32 = arith.constant 0 : i32
    %c0_i32_0 = arith.constant 0 : i32
    %c0_i32_1 = arith.constant 0 : i32
    return %c0_i32, %c0_i32_0 : i32, i32
  }
  func.func @transform_5(%arg0: i32) -> (i32, i32) {
    %c0_i32 = arith.constant 0 : i32
    %c0_i32_0 = arith.constant 0 : i32
    %c0_i32_1 = arith.constant 0 : i32
    return %c0_i32, %c0_i32_0 : i32, i32
  }
  func.func @transform_6(%arg0: i32) -> (i32, i32) {
    %c0_i32 = arith.constant 0 : i32
    %c0_i32_0 = arith.constant 0 : i32
    %c0_i32_1 = arith.constant 0 : i32
    return %c0_i32, %c0_i32_0 : i32, i32
  }
  func.func @transform_7(%arg0: i32) -> (i32, i32) {
    %c0_i32 = arith.constant 0 : i32
    %c0_i32_0 = arith.constant 0 : i32
    %c0_i32_1 = arith.constant 0 : i32
    return %c0_i32, %c0_i32_0 : i32, i32
  }
}

</mosaic_0001>

<llo_original>
// kernel: tpu_custom_call.1
$region0: #{tpu_custom_call.1}
  #allocation0 [shape = 'u32[]', space=smem, size = 0x4, offset = 0x4, fixed_abs, tag = 'smem constant byte address 0x4 - core index']
  #allocation1 [shape = 'u32[144,128]{1,0:T(1,128)}', space=vmem, size = 0x12000, scoped, tag = 'internal scratch']
  %s0 = inlined_call_operand.hbm [shape: f32[37,256], index: 0, kind: input, shape index: {}]
  %s1 = inlined_call_operand.hbm [shape: f32[256,128], index: 1, kind: input, shape index: {}]
  %s2 = inlined_call_operand.vmem [shape: f32[1,128], index: 2, kind: input, shape index: {}]
  %s3 = inlined_call_operand.vmem [shape: f32[1,128], index: 3, kind: input, shape index: {}]
  %s4 = inlined_call_operand.vmem [shape: f32[1,128], index: 4, kind: input, shape index: {}]
  %s5 = inlined_call_operand.hbm [shape: f32[128,128], index: 5, kind: input, shape index: {}]
  %s6 = inlined_call_operand.vmem [shape: f32[1,128], index: 6, kind: input, shape index: {}]
  %s7 = inlined_call_operand.hbm [shape: f32[37,128], index: 7, kind: output, shape index: {}]
  %s8 = sld [smem:[#allocation0]]
  $region50: #{tpu_custom_call.1} parent=0
    _
  %s10 = ssub.s32 1, %s8
  %s11 = scalar_select 0, %s10, %s8
  $region1: #{tpu_custom_call.1} parent=0
    #allocation2 [shape = 'u8[40960]{0}', space=vmem, size = 0xa000, scoped, tag = 'input window, operand 0, single buffered']
    #allocation3 [shape = 's32[1]{0}', space=sflag, size = 0x4, scoped, tag = 'scoped memory for tpu_custom_call.1']
    #allocation4 [shape = 's32[1]{0}', space=sflag, size = 0x4, scoped, tag = 'scoped memory for tpu_custom_call.1']
    #allocation5 [shape = 'u8[131072]{0}', space=vmem, size = 0x20000, scoped, tag = 'input window, operand 1, single buffered']
    #allocation6 [shape = 's32[1]{0}', space=sflag, size = 0x4, scoped, tag = 'scoped memory for tpu_custom_call.1']
    #allocation7 [shape = 'u8[65536]{0}', space=vmem, size = 0x10000, scoped, tag = 'input window, operand 5, single buffered']
    #allocation8 [shape = 'u8[20480]{0}', space=vmem, size = 0x5000, scoped, tag = 'output window, operand 0, single buffered']
    %12 = vsyncpa [#allocation3], 0
    %13 = vsyncpa [#allocation6], 0
    %14 = vsyncpa [#allocation4], 0
    // Predicated region
    $region2: #{tpu_custom_call.1} parent=1 // pred_check
      _
    $region3: #{tpu_custom_call.1} parent=1 // pred_check_branch
      %16 = sbr.rel (0) target = $region5
    $region4: #{tpu_custom_call.1} parent=1 // pred_region
      %s18 = ssub.s32 1280, 1280
      %19 = vsyncadd [#allocation3], %s18
      %s20 = sshll.u32 [#allocation2], 4
      %s21 = int_to_ptr.vmem [resolvable:$true] %s20
      %26 = dma.hbm_to_vmem [thread:$0]  %s0, 1280, %s21, [#allocation3], 256, 256, 16
    $region5: #{tpu_custom_call.1} parent=1 // pred_fallthru
      _
    // Predicated region
    $region6: #{tpu_custom_call.1} parent=1 // pred_check
      _
    $region7: #{tpu_custom_call.1} parent=1 // pred_check_branch
      %28 = sbr.rel (0) target = $region9
    $region8: #{tpu_custom_call.1} parent=1 // pred_region
      %s30 = ssub.s32 4096, 4096
      %31 = vsyncadd [#allocation6], %s30
      %s32 = sshll.u32 [#allocation5], 4
      %s33 = int_to_ptr.vmem [resolvable:$true] %s32
      %38 = dma.hbm_to_vmem [thread:$0]  %s1, 4096, %s33, [#allocation6], 128, 128, 8
    $region9: #{tpu_custom_call.1} parent=1 // pred_fallthru
      _
    // Predicated region
    $region10: #{tpu_custom_call.1} parent=1 // pred_check
      _
    $region11: #{tpu_custom_call.1} parent=1 // pred_check_branch
      %40 = sbr.rel (0) target = $region13
    $region12: #{tpu_custom_call.1} parent=1 // pred_region
      _
    $region13: #{tpu_custom_call.1} parent=1 // pred_fallthru
      _
    // Predicated region
    $region14: #{tpu_custom_call.1} parent=1 // pred_check
      _
    $region15: #{tpu_custom_call.1} parent=1 // pred_check_branch
      %42 = sbr.rel (0) target = $region17
    $region16: #{tpu_custom_call.1} parent=1 // pred_region
      _
    $region17: #{tpu_custom_call.1} parent=1 // pred_fallthru
      _
    // Predicated region
    $region18: #{tpu_custom_call.1} parent=1 // pred_check
      _
    $region19: #{tpu_custom_call.1} parent=1 // pred_check_branch
      %44 = sbr.rel (0) target = $region21
    $region20: #{tpu_custom_call.1} parent=1 // pred_region
      _
    $region21: #{tpu_custom_call.1} parent=1 // pred_fallthru
      _
    // Predicated region
    $region22: #{tpu_custom_call.1} parent=1 // pred_check
      _
    $region23: #{tpu_custom_call.1} parent=1 // pred_check_branch
      %46 = sbr.rel (0) target = $region25
    $region24: #{tpu_custom_call.1} parent=1 // pred_region
      %s48 = ssub.s32 2048, 2048
      %49 = vsyncadd [#allocation6], %s48
      %s50 = sshll.u32 [#allocation7], 4
      %s51 = int_to_ptr.vmem [resolvable:$true] %s50
      %56 = dma.hbm_to_vmem [thread:$0]  %s5, 2048, %s51, [#allocation6], 128, 128, 8
    $region25: #{tpu_custom_call.1} parent=1 // pred_fallthru
      _
    // Predicated region
    $region26: #{tpu_custom_call.1} parent=1 // pred_check
      _
    $region27: #{tpu_custom_call.1} parent=1 // pred_check_branch
      %58 = sbr.rel (0) target = $region29
    $region28: #{tpu_custom_call.1} parent=1 // pred_region
      _
    $region29: #{tpu_custom_call.1} parent=1 // pred_fallthru
      _
    // Predicated region
    $region30: #{tpu_custom_call.1} parent=1 // pred_check
      _
    $region31: #{tpu_custom_call.1} parent=1 // pred_check_branch
      %60 = sbr.rel (0) target = $region33
    $region32: #{tpu_custom_call.1} parent=1 // pred_region
      %61 = dma.done [#allocation3], 1280
    $region33: #{tpu_custom_call.1} parent=1 // pred_fallthru
      _
    // Predicated region
    $region34: #{tpu_custom_call.1} parent=1 // pred_check
      _
    $region35: #{tpu_custom_call.1} parent=1 // pred_check_branch
      %63 = sbr.rel (0) target = $region37
    $region36: #{tpu_custom_call.1} parent=1 // pred_region
      %64 = dma.done [#allocation6], 4096
    $region37: #{tpu_custom_call.1} parent=1 // pred_fallthru
      _
    // Predicated region
    $region38: #{tpu_custom_call.1} parent=1 // pred_check
      _
    $region39: #{tpu_custom_call.1} parent=1 // pred_check_branch
      %66 = sbr.rel (0) target = $region41
    $region40: #{tpu_custom_call.1} parent=1 // pred_region
      %67 = dma.done [#allocation6], 2048
    $region41: #{tpu_custom_call.1} parent=1 // pred_fallthru
      _
    %v68 = vld [vmem:[#allocation5] sm:$0xff]
    %v69 = vld [vmem:[#allocation5 + $0x8] sm:$0xff]
    %v70 = vld [vmem:[#allocation5 + $0x10] sm:$0xff]
    %v71 = vld [vmem:[#allocation5 + $0x18] sm:$0xff]
    %v72 = vld [vmem:[#allocation5 + $0x20] sm:$0xff]
    %v73 = vld [vmem:[#allocation5 + $0x28] sm:$0xff]
    %v74 = vld [vmem:[#allocation5 + $0x30] sm:$0xff]
    %v75 = vld [vmem:[#allocation5 + $0x38] sm:$0xff]
    %v76 = vld [vmem:[#allocation5 + $0x40] sm:$0xff]
    %v77 = vld [vmem:[#allocation5 + $0x48] sm:$0xff]
    %v78 = vld [vmem:[#allocation5 + $0x50] sm:$0xff]
    %v79 = vld [vmem:[#allocation5 + $0x58] sm:$0xff]
    %v80 = vld [vmem:[#allocation5 + $0x60] sm:$0xff]
    %v81 = vld [vmem:[#allocation5 + $0x68] sm:$0xff]
    %v82 = vld [vmem:[#allocation5 + $0x70] sm:$0xff]
    %v83 = vld [vmem:[#allocation5 + $0x78] sm:$0xff]
    %v84 = vld [vmem:[#allocation5 + $0x80] sm:$0xff]
    %v85 = vld [vmem:[#allocation5 + $0x88] sm:$0xff]
    %v86 = vld [vmem:[#allocation5 + $0x90] sm:$0xff]
    %v87 = vld [vmem:[#allocation5 + $0x98] sm:$0xff]
    %v88 = vld [vmem:[#allocation5 + $0xa0] sm:$0xff]
    %v89 = vld [vmem:[#allocation5 + $0xa8] sm:$0xff]
    %v90 = vld [vmem:[#allocation5 + $0xb0] sm:$0xff]
    %v91 = vld [vmem:[#allocation5 + $0xb8] sm:$0xff]
    %v92 = vld [vmem:[#allocation5 + $0xc0] sm:$0xff]
    %v93 = vld [vmem:[#allocation5 + $0xc8] sm:$0xff]
    %v94 = vld [vmem:[#allocation5 + $0xd0] sm:$0xff]
    %v95 = vld [vmem:[#allocation5 + $0xd8] sm:$0xff]
    %v96 = vld [vmem:[#allocation5 + $0xe0] sm:$0xff]
    %v97 = vld [vmem:[#allocation5 + $0xe8] sm:$0xff]
    %v98 = vld [vmem:[#allocation5 + $0xf0] sm:$0xff]
    %v99 = vld [vmem:[#allocation5 + $0xf8] sm:$0xff]
    %v100 = vld [vmem:[#allocation2] sm:$0xff]
    %v101 = vld [vmem:[#allocation2 + $0x8] sm:$0xff]
    %v102 = vld [vmem:[#allocation2 + $0x10] sm:$0xff]
    %v103 = vld [vmem:[#allocation2 + $0x18] sm:$0xff]
    %v104 = vld [vmem:[#allocation2 + $0x20] sm:$0xff]
    %v105 = vld [vmem:[#allocation2 + $0x28] sm:$0xff]
    %v106 = vld [vmem:[#allocation2 + $0x30] sm:$0xff]
    %v107 = vld [vmem:[#allocation2 + $0x38] sm:$0xff]
    %v108 = vld [vmem:[#allocation2 + $0x40] sm:$0x1f]
    %v109 = vld [vmem:[#allocation2 + $0x48] sm:$0x1f]
    %v110 = vld [vmem:[%s2] sm:$0x1]
    %v112 = vlaneseq
    %v113 = vshrl.u32 %v112, 7
    %v114 = vsub.s32 0, %v113
    %v115 = vrot.slane %v110, %v114
    %117 = vmatprep.subr.mxu0 0.0
    %118 = vmatpush1.msra.mxu0 %v68
    %119 = vmatprep.subr.mxu0 0.0
    %120 = vmatpush1.msra.mxu0 %v69
    %121 = vmatprep.subr.mxu0 0.0
    %122 = vmatpush1.msra.mxu0 %v70
    %123 = vmatprep.subr.mxu0 0.0
    %124 = vmatpush1.msra.mxu0 %v71
    %125 = vmatprep.subr.mxu0 0.0
    %126 = vmatpush1.msra.mxu0 %v72
    %127 = vmatprep.subr.mxu0 0.0
    %128 = vmatpush1.msra.mxu0 %v73
    %129 = vmatprep.subr.mxu0 0.0
    %130 = vmatpush1.msra.mxu0 %v74
    %131 = vmatprep.subr.mxu0 0.0
    %132 = vmatpush1.msra.mxu0 %v75
    %133 = vmatprep.subr.mxu0 0.0
    %134 = vmatpush1.msra.mxu0 %v76
    %135 = vmatprep.subr.mxu0 0.0
    %136 = vmatpush1.msra.mxu0 %v77
    %137 = vmatprep.subr.mxu0 0.0
    %138 = vmatpush1.msra.mxu0 %v78
    %139 = vmatprep.subr.mxu0 0.0
    %140 = vmatpush1.msra.mxu0 %v79
    %141 = vmatprep.subr.mxu0 0.0
    %142 = vmatpush1.msra.mxu0 %v80
    %143 = vmatprep.subr.mxu0 0.0
    %144 = vmatpush1.msra.mxu0 %v81
    %145 = vmatprep.subr.mxu0 0.0
    %146 = vmatpush1.msra.mxu0 %v82
    %147 = vmatprep.subr.mxu0 0.0
    %148 = vmatpush1.msra.mxu0 %v83
    %149 = vmatprep.subr.mxu0 0.0
    %150 = vmatpush1.msra.mxu0 %v84
    %151 = vmatprep.subr.mxu0 0.0
    %152 = vmatpush1.msra.mxu0 %v85
    %153 = vmatprep.subr.mxu0 0.0
    %154 = vmatpush1.msra.mxu0 %v86
    %155 = vmatprep.subr.mxu0 0.0
    %156 = vmatpush1.msra.mxu0 %v87
    %157 = vmatprep.subr.mxu0 0.0
    %158 = vmatpush1.msra.mxu0 %v88
    %159 = vmatprep.subr.mxu0 0.0
    %160 = vmatpush1.msra.mxu0 %v89
    %161 = vmatprep.subr.mxu0 0.0
    %162 = vmatpush1.msra.mxu0 %v90
    %163 = vmatprep.subr.mxu0 0.0
    %164 = vmatpush1.msra.mxu0 %v91
    %165 = vmatprep.subr.mxu0 0.0
    %166 = vmatpush1.msra.mxu0 %v92
    %167 = vmatprep.subr.mxu0 0.0
    %168 = vmatpush1.msra.mxu0 %v93
    %169 = vmatprep.subr.mxu0 0.0
    %170 = vmatpush1.msra.mxu0 %v94
    %171 = vmatprep.subr.mxu0 0.0
    %172 = vmatpush1.msra.mxu0 %v95
    %173 = vmatprep.subr.mxu0 0.0
    %174 = vmatpush1.msra.mxu0 %v96
    %175 = vmatprep.subr.mxu0 0.0
    %176 = vmatpush1.msra.mxu0 %v97
    %177 = vmatprep.subr.mxu0 0.0
    %178 = vmatpush1.msra.mxu0 %v98
    %179 = vmatprep.subr.mxu0 0.0
    %180 = vmatpush1.msra.mxu0 %v99
    %181 = vmatprep.mubr.f32.mxu0 %v101
    %182 = vmatmul.mubr.f32.gmra.mrb[0].mxu0 %v100
    %v183 = vpop.f32.mrb[0].mxu0
    %v184 = vadd.f32 %v115, %v183
    %v185 = vpop.f32.mrb[0].mxu0
    %186 = vmatprep.mubr.f32.mxu0 %v103
    %187 = vmatmul.mubr.f32.gmra.mrb[0].mxu0 %v102
    %v188 = vpop.f32.mrb[0].mxu0
    %v189 = vadd.f32 %v115, %v188
    %v190 = vpop.f32.mrb[0].mxu0
    %191 = vmatprep.mubr.f32.mxu0 %v105
    %192 = vmatmul.mubr.f32.gmra.mrb[0].mxu0 %v104
    %v193 = vpop.f32.mrb[0].mxu0
    %v194 = vadd.f32 %v115, %v193
    %v195 = vpop.f32.mrb[0].mxu0
    %196 = vmatprep.mubr.f32.mxu0 %v107
    %197 = vmatmul.mubr.f32.gmra.mrb[0].mxu0 %v106
    %v198 = vpop.f32.mrb[0].mxu0
    %v199 = vadd.f32 %v115, %v198
    %v200 = vpop.f32.mrb[0].mxu0
    %201 = vmatprep.mubr.f32.mxu0 %v109
    %202 = vmatmul.mubr.f32.gmra.mrb[0].mxu0 %v108
    %v203 = vpop.f32.mrb[0].mxu0
    %v204 = vadd.f32 %v115, %v203
    %v205 = vpop.f32.mrb[0].mxu0
    %206 = vdwg.mxu0
    %v207 = vmax.f32 %v184, 0.0
    %v208 = vmax.f32 %v189, 0.0
    %v209 = vmax.f32 %v194, 0.0
    %v210 = vmax.f32 %v199, 0.0
    %v211 = vmax.f32 %v204, 0.0
    %vm212 = vcmask 302080
    %v214 = vsel %vm212, 1.0, 0
    %vm216 = vcmask 1044480
    %v218 = vsel %vm216, %v211, 0
    %220 = vmatprep.subr.mxu0 0.0
    %221 = vmatpush1.msra.mxu0 %v207
    %222 = vmatprep.subr.mxu0 0.0
    %223 = vmatpush1.msra.mxu0 %v208
    %224 = vmatprep.subr.mxu0 0.0
    %225 = vmatpush1.msra.mxu0 %v209
    %226 = vmatprep.subr.mxu0 0.0
    %227 = vmatpush1.msra.mxu0 %v210
    %228 = vmatprep.subr.mxu0 0.0
    %229 = vmatpush1.msra.mxu0 %v218
    %230 = vmatprep.subr.mxu0 0.0
    %231 = vmatpush1.msra.mxu0 0.0
    %232 = vmatprep.subr.mxu0 0.0
    %233 = vmatpush1.msra.mxu0 0.0
    %234 = vmatprep.subr.mxu0 0.0
    %235 = vmatpush1.msra.mxu0 0.0
    %236 = vmatprep.subr.mxu0 0.0
    %237 = vmatpush1.msra.mxu0 0.0
    %238 = vmatprep.subr.mxu0 0.0
    %239 = vmatpush1.msra.mxu0 0.0
    %240 = vmatprep.subr.mxu0 0.0
    %241 = vmatpush1.msra.mxu0 0.0
    %242 = vmatprep.subr.mxu0 0.0
    %243 = vmatpush1.msra.mxu0 0.0
    %244 = vmatprep.subr.mxu0 0.0
    %245 = vmatpush1.msra.mxu0 0.0
    %246 = vmatprep.subr.mxu0 0.0
    %247 = vmatpush1.msra.mxu0 0.0
    %248 = vmatprep.subr.mxu0 0.0
    %249 = vmatpush1.msra.mxu0 0.0
    %250 = vmatprep.subr.mxu0 0.0
    %251 = vmatpush1.msra.mxu0 0.0
    %252 = vmatprep.subr.mxu0 0.0
    %253 = vmatpush1.msra.mxu0 0.0
    %254 = vmatprep.subr.mxu0 0.0
    %255 = vmatpush1.msra.mxu0 0.0
    %256 = vmatprep.subr.mxu0 0.0
    %257 = vmatpush1.msra.mxu0 0.0
    %258 = vmatprep.subr.mxu0 0.0
    %259 = vmatpush1.msra.mxu0 0.0
    %260 = vmatprep.subr.mxu0 0.0
    %261 = vmatpush1.msra.mxu0 0.0
    %262 = vmatprep.subr.mxu0 0.0
    %263 = vmatpush1.msra.mxu0 0.0
    %264 = vmatprep.subr.mxu0 0.0
    %265 = vmatpush1.msra.mxu0 0.0
    %266 = vmatprep.subr.mxu0 0.0
    %267 = vmatpush1.msra.mxu0 0.0
    %268 = vmatprep.subr.mxu0 0.0
    %269 = vmatpush1.msra.mxu0 0.0
    %270 = vmatprep.subr.mxu0 0.0
    %271 = vmatpush1.msra.mxu0 0.0
    %272 = vmatprep.subr.mxu0 0.0
    %273 = vmatpush1.msra.mxu0 0.0
    %274 = vmatprep.subr.mxu0 0.0
    %275 = vmatpush1.msra.mxu0 0.0
    %276 = vmatprep.subr.mxu0 0.0
    %277 = vmatpush1.msra.mxu0 0.0
    %278 = vmatprep.subr.mxu0 0.0
    %279 = vmatpush1.msra.mxu0 0.0
    %280 = vmatprep.subr.mxu0 0.0
    %281 = vmatpush1.msra.mxu0 0.0
    %282 = vmatprep.subr.mxu0 0.0
    %283 = vmatpush1.msra.mxu0 0.0
    %284 = vmatprep.mubr.f32.mxu0 0.0
    %285 = vmatmul.mubr.f32.gmra.mrb[0].mxu0 %v214
    %v286 = vpop.f32.mrb[0].mxu0
    %v287 = vadd.f32 0.0, %v286
    %v288 = vpop.f32.mrb[0].mxu0
    %289 = vdwg.mxu0
    %v290 = vmul.f32 %v287, 0.027027028
    %v291 = vlaneseq
    %v292 = vshrl.u32 %v291, 7
    %v293 = vsub.s32 0, %v292
    %v294 = vrot.slane %v290, %v293
    %v295 = vsub.f32 %v207, %v294
    %v296 = vsub.f32 %v208, %v294
    %v297 = vsub.f32 %v209, %v294
    %v298 = vsub.f32 %v210, %v294
    %v299 = vsub.f32 %v211, %v294
    %v300 = vmul.f32 %v295, %v295
    %v301 = vmul.f32 %v296, %v296
    %v302 = vmul.f32 %v297, %v297
    %v303 = vmul.f32 %v298, %v298
    %v304 = vmul.f32 %v299, %v299
    %v306 = vsel %vm216, %v304, 0
    %308 = vmatprep.subr.mxu0 0.0
    %309 = vmatpush1.msra.mxu0 %v300
    %310 = vmatprep.subr.mxu0 0.0
    %311 = vmatpush1.msra.mxu0 %v301
    %312 = vmatprep.subr.mxu0 0.0
    %313 = vmatpush1.msra.mxu0 %v302
    %314 = vmatprep.subr.mxu0 0.0
    %315 = vmatpush1.msra.mxu0 %v303
    %316 = vmatprep.subr.mxu0 0.0
    %317 = vmatpush1.msra.mxu0 %v306
    %318 = vmatprep.subr.mxu0 0.0
    %319 = vmatpush1.msra.mxu0 0.0
    %320 = vmatprep.subr.mxu0 0.0
    %321 = vmatpush1.msra.mxu0 0.0
    %322 = vmatprep.subr.mxu0 0.0
    %323 = vmatpush1.msra.mxu0 0.0
    %324 = vmatprep.subr.mxu0 0.0
    %325 = vmatpush1.msra.mxu0 0.0
    %326 = vmatprep.subr.mxu0 0.0
    %327 = vmatpush1.msra.mxu0 0.0
    %328 = vmatprep.subr.mxu0 0.0
    %329 = vmatpush1.msra.mxu0 0.0
    %330 = vmatprep.subr.mxu0 0.0
    %331 = vmatpush1.msra.mxu0 0.0
    %332 = vmatprep.subr.mxu0 0.0
    %333 = vmatpush1.msra.mxu0 0.0
    %334 = vmatprep.subr.mxu0 0.0
    %335 = vmatpush1.msra.mxu0 0.0
    %336 = vmatprep.subr.mxu0 0.0
    %337 = vmatpush1.msra.mxu0 0.0
    %338 = vmatprep.subr.mxu0 0.0
    %339 = vmatpush1.msra.mxu0 0.0
    %340 = vmatprep.subr.mxu0 0.0
    %341 = vmatpush1.msra.mxu0 0.0
    %342 = vmatprep.subr.mxu0 0.0
    %343 = vmatpush1.msra.mxu0 0.0
    %344 = vmatprep.subr.mxu0 0.0
    %345 = vmatpush1.msra.mxu0 0.0
    %346 = vmatprep.subr.mxu0 0.0
    %347 = vmatpush1.msra.mxu0 0.0
    %348 = vmatprep.subr.mxu0 0.0
    %349 = vmatpush1.msra.mxu0 0.0
    %350 = vmatprep.subr.mxu0 0.0
    %351 = vmatpush1.msra.mxu0 0.0
    %352 = vmatprep.subr.mxu0 0.0
    %353 = vmatpush1.msra.mxu0 0.0
    %354 = vmatprep.subr.mxu0 0.0
    %355 = vmatpush1.msra.mxu0 0.0
    %356 = vmatprep.subr.mxu0 0.0
    %357 = vmatpush1.msra.mxu0 0.0
    %358 = vmatprep.subr.mxu0 0.0
    %359 = vmatpush1.msra.mxu0 0.0
    %360 = vmatprep.subr.mxu0 0.0
    %361 = vmatpush1.msra.mxu0 0.0
    %362 = vmatprep.subr.mxu0 0.0
    %363 = vmatpush1.msra.mxu0 0.0
    %364 = vmatprep.subr.mxu0 0.0
    %365 = vmatpush1.msra.mxu0 0.0
    %366 = vmatprep.subr.mxu0 0.0
    %367 = vmatpush1.msra.mxu0 0.0
    %368 = vmatprep.subr.mxu0 0.0
    %369 = vmatpush1.msra.mxu0 0.0
    %370 = vmatprep.subr.mxu0 0.0
    %371 = vmatpush1.msra.mxu0 0.0
    %372 = vmatprep.mubr.f32.mxu0 0.0
    %373 = vmatmul.mubr.f32.gmra.mrb[0].mxu0 %v214
    %v374 = vpop.f32.mrb[0].mxu0
    %v375 = vadd.f32 0.0, %v374
    %v376 = vpop.f32.mrb[0].mxu0
    %377 = vdwg.mxu0
    %v378 = vmul.f32 %v375, 0.027027028
    %v379 = vld [vmem:[%s3] sm:$0x1]
    %v380 = vadd.f32 %v378, 1e-05
    %v381 = vrsqrt.pop %v380
    %v382 = vmul.f32 %v379, %v381
    %v383 = vld [vmem:[%s4] sm:$0x1]
    %v384 = vmul.f32 %v290, %v382
    %v385 = vsub.f32 %v383, %v384
    %v386 = vld [vmem:[#allocation7] sm:$0xff]
    %v387 = vld [vmem:[#allocation7 + $0x8] sm:$0xff]
    %v388 = vld [vmem:[#allocation7 + $0x10] sm:$0xff]
    %v389 = vld [vmem:[#allocation7 + $0x18] sm:$0xff]
    %v390 = vld [vmem:[#allocation7 + $0x20] sm:$0xff]
    %v391 = vld [vmem:[#allocation7 + $0x28] sm:$0xff]
    %v392 = vld [vmem:[#allocation7 + $0x30] sm:$0xff]
    %v393 = vld [vmem:[#allocation7 + $0x38] sm:$0xff]
    %v394 = vld [vmem:[#allocation7 + $0x40] sm:$0xff]
    %v395 = vld [vmem:[#allocation7 + $0x48] sm:$0xff]
    %v396 = vld [vmem:[#allocation7 + $0x50] sm:$0xff]
    %v397 = vld [vmem:[#allocation7 + $0x58] sm:$0xff]
    %v398 = vld [vmem:[#allocation7 + $0x60] sm:$0xff]
    %v399 = vld [vmem:[#allocation7 + $0x68] sm:$0xff]
    %v400 = vld [vmem:[#allocation7 + $0x70] sm:$0xff]
    %v401 = vld [vmem:[#allocation7 + $0x78] sm:$0xff]
    %v403 = vlaneseq
    %v404 = vshrl.u32 %v403, 7
    %v405 = vsub.s32 0, %v404
    %v406 = vrot.slane %v382, %v405
    %v408 = vmul.f32 %v207, %v406
    %v409 = vmul.f32 %v208, %v406
    %v410 = vmul.f32 %v209, %v406
    %v411 = vmul.f32 %v210, %v406
    %v412 = vmul.f32 %v211, %v406
    %v414 = vlaneseq
    %v415 = vshrl.u32 %v414, 7
    %v416 = vsub.s32 0, %v415
    %v417 = vrot.slane %v385, %v416
    %v419 = vadd.f32 %v408, %v417
    %v420 = vadd.f32 %v409, %v417
    %v421 = vadd.f32 %v410, %v417
    %v422 = vadd.f32 %v411, %v417
    %v423 = vadd.f32 %v412, %v417
    %v424 = vld [vmem:[%s6] sm:$0x1]
    %v426 = vlaneseq
    %v427 = vshrl.u32 %v426, 7
    %v428 = vsub.s32 0, %v427
    %v429 = vrot.slane %v424, %v428
    %431 = vmatprep.subr.mxu0 0.0
    %432 = vmatpush1.msra.mxu0 %v386
    %433 = vmatprep.subr.mxu0 0.0
    %434 = vmatpush1.msra.mxu0 %v387
    %435 = vmatprep.subr.mxu0 0.0
    %436 = vmatpush1.msra.mxu0 %v388
    %437 = vmatprep.subr.mxu0 0.0
    %438 = vmatpush1.msra.mxu0 %v389
    %439 = vmatprep.subr.mxu0 0.0
    %440 = vmatpush1.msra.mxu0 %v390
    %441 = vmatprep.subr.mxu0 0.0
    %442 = vmatpush1.msra.mxu0 %v391
    %443 = vmatprep.subr.mxu0 0.0
    %444 = vmatpush1.msra.mxu0 %v392
    %445 = vmatprep.subr.mxu0 0.0
    %446 = vmatpush1.msra.mxu0 %v393
    %447 = vmatprep.subr.mxu0 0.0
    %448 = vmatpush1.msra.mxu0 %v394
    %449 = vmatprep.subr.mxu0 0.0
    %450 = vmatpush1.msra.mxu0 %v395
    %451 = vmatprep.subr.mxu0 0.0
    %452 = vmatpush1.msra.mxu0 %v396
    %453 = vmatprep.subr.mxu0 0.0
    %454 = vmatpush1.msra.mxu0 %v397
    %455 = vmatprep.subr.mxu0 0.0
    %456 = vmatpush1.msra.mxu0 %v398
    %457 = vmatprep.subr.mxu0 0.0
    %458 = vmatpush1.msra.mxu0 %v399
    %459 = vmatprep.subr.mxu0 0.0
    %460 = vmatpush1.msra.mxu0 %v400
    %461 = vmatprep.subr.mxu0 0.0
    %462 = vmatpush1.msra.mxu0 %v401
    %463 = vmatprep.subr.mxu0 0.0
    %464 = vmatpush1.msra.mxu0 0.0
    %465 = vmatprep.subr.mxu0 0.0
    %466 = vmatpush1.msra.mxu0 0.0
    %467 = vmatprep.subr.mxu0 0.0
    %468 = vmatpush1.msra.mxu0 0.0
    %469 = vmatprep.subr.mxu0 0.0
    %470 = vmatpush1.msra.mxu0 0.0
    %471 = vmatprep.subr.mxu0 0.0
    %472 = vmatpush1.msra.mxu0 0.0
    %473 = vmatprep.subr.mxu0 0.0
    %474 = vmatpush1.msra.mxu0 0.0
    %475 = vmatprep.subr.mxu0 0.0
    %476 = vmatpush1.msra.mxu0 0.0
    %477 = vmatprep.subr.mxu0 0.0
    %478 = vmatpush1.msra.mxu0 0.0
    %479 = vmatprep.subr.mxu0 0.0
    %480 = vmatpush1.msra.mxu0 0.0
    %481 = vmatprep.subr.mxu0 0.0
    %482 = vmatpush1.msra.mxu0 0.0
    %483 = vmatprep.subr.mxu0 0.0
    %484 = vmatpush1.msra.mxu0 0.0
    %485 = vmatprep.subr.mxu0 0.0
    %486 = vmatpush1.msra.mxu0 0.0
    %487 = vmatprep.subr.mxu0 0.0
    %488 = vmatpush1.msra.mxu0 0.0
    %489 = vmatprep.subr.mxu0 0.0
    %490 = vmatpush1.msra.mxu0 0.0
    %491 = vmatprep.subr.mxu0 0.0
    %492 = vmatpush1.msra.mxu0 0.0
    %493 = vmatprep.subr.mxu0 0.0
    %494 = vmatpush1.msra.mxu0 0.0
    %495 = vmatprep.mubr.f32.mxu0 0.0
    %496 = vmatmul.mubr.f32.gmra.mrb[0].mxu0 %v419
    %v497 = vpop.f32.mrb[0].mxu0
    %v498 = vadd.f32 %v429, %v497
    %v499 = vpop.f32.mrb[0].mxu0
    %500 = vmatprep.mubr.f32.mxu0 0.0
    %501 = vmatmul.mubr.f32.gmra.mrb[0].mxu0 %v420
    %v502 = vpop.f32.mrb[0].mxu0
    %v503 = vadd.f32 %v429, %v502
    %v504 = vpop.f32.mrb[0].mxu0
    %505 = vmatprep.mubr.f32.mxu0 0.0
    %506 = vmatmul.mubr.f32.gmra.mrb[0].mxu0 %v421
    %v507 = vpop.f32.mrb[0].mxu0
    %v508 = vadd.f32 %v429, %v507
    %v509 = vpop.f32.mrb[0].mxu0
    %510 = vmatprep.mubr.f32.mxu0 0.0
    %511 = vmatmul.mubr.f32.gmra.mrb[0].mxu0 %v422
    %v512 = vpop.f32.mrb[0].mxu0
    %v513 = vadd.f32 %v429, %v512
    %v514 = vpop.f32.mrb[0].mxu0
    %515 = vmatprep.mubr.f32.mxu0 0.0
    %516 = vmatmul.mubr.f32.gmra.mrb[0].mxu0 %v423
    %v517 = vpop.f32.mrb[0].mxu0
    %v518 = vadd.f32 %v429, %v517
    %v519 = vpop.f32.mrb[0].mxu0
    %520 = vdwg.mxu0
    %521 = vst [vmem:[#allocation8] sm:$0xff] %v498
    %522 = vst [vmem:[#allocation8 + $0x8] sm:$0xff] %v503
    %523 = vst [vmem:[#allocation8 + $0x10] sm:$0xff] %v508
    %524 = vst [vmem:[#allocation8 + $0x18] sm:$0xff] %v513
    %525 = vst [vmem:[#allocation8 + $0x20] sm:$0x1f] %v518
    // Predicated region
    $region42: #{tpu_custom_call.1} parent=1 // pred_check
      _
    $region43: #{tpu_custom_call.1} parent=1 // pred_check_branch
      %527 = sbr.rel (0) target = $region45
    $region44: #{tpu_custom_call.1} parent=1 // pred_region
      %s529 = ssub.s32 640, 640
      %530 = vsyncadd [#allocation4], %s529
      %s531 = sshll.u32 [#allocation8], 4
      %s532 = int_to_ptr.vmem [resolvable:$true] %s531
      %537 = dma.vmem_to_hbm [thread:$0]  %s532, 640, %s7, [#allocation4], 128, 128, 8
    $region45: #{tpu_custom_call.1} parent=1 // pred_fallthru
      _
    // Predicated region
    $region46: #{tpu_custom_call.1} parent=1 // pred_check
      _
    $region47: #{tpu_custom_call.1} parent=1 // pred_check_branch
      %539 = sbr.rel (0) target = $region49
    $region48: #{tpu_custom_call.1} parent=1 // pred_region
      %540 = dma.done [#allocation4], 640
    $region49: #{tpu_custom_call.1} parent=1 // pred_fallthru
      _
    %541 = vsyncpa [#allocation3], 1
    %542 = vsyncpa [#allocation6], 1
    %543 = vsyncpa [#allocation4], 1

</llo_original>
